<compile_context>
chip_gen: v7x
topology: tpu7x:2x2x1
jax: 0.10.0
libtpu: 0.0.40
codegen_flags: <defaults>
</compile_context>

<pallas_src>
import functools

import jax
import jax.numpy as jnp
from jax.experimental import pallas as pl
from jax.experimental.pallas import tpu as pltpu

ALPHA = 1.0
GAMMA = 2.0

LANE = 128
_MIB = 1024 * 1024
_DEFAULT_VMEM_BYTES = 64 * _MIB        # conservative fallback (v7x per-TC VMEM)
_MIN_SPLIT_HALF_BYTES = 1 * _MIB       # 2-way split only if each half >= 1 MiB (f32)


def _int_pow(q, k):
    """q**k for a static non-negative integer k via square-and-multiply (VPU only)."""
    if k == 0:
        return jnp.ones_like(q)
    result = None
    base = q
    while k:
        if k & 1:
            result = base if result is None else result * base
        k >>= 1
        if k:
            base = base * base
    return result


def _focal_kernel(x_ref, t_ref, o_ref, *, alpha, gamma, gamma_int):
    x = x_ref[...].astype(jnp.float32)
    t = t_ref[...].astype(jnp.float32)
    # Numerically-stable BCE-with-logits (== F.binary_cross_entropy_with_logits):
    #   bce = max(x, 0) - x*t + log1p(exp(-|x|))
    e = jnp.exp(-jnp.abs(x))                              # EUP
    bce = jnp.maximum(x, 0.0) - x * t + jnp.log1p(e)      # EUP(log1p) + VPU
    p = jnp.exp(-bce)                                     # EUP (exact for soft targets too)
    q = 1.0 - p
    if gamma_int is not None:
        w = _int_pow(q, gamma_int)                        # default gamma=2 -> q*q, VPU only
    else:
        w = q ** gamma                                    # fractional gamma fallback (pow)
    res = w * bce
    if alpha != 1.0:
        res = alpha * res
    o_ref[...] = res.astype(o_ref.dtype)


def _vmem_capacity_bytes():
    get_info = getattr(pltpu, "get_tpu_info", None)
    if get_info is not None:
        try:
            cap = int(getattr(get_info(), "vmem_capacity_bytes", 0) or 0)
            if cap > 0:
                return cap
        except Exception:
            pass
    return _DEFAULT_VMEM_BYTES


def focal_loss_pallas(inputs, targets, alpha=ALPHA, gamma=GAMMA, out_dtype=None):
    """Elementwise focal loss (reduction='none'), any input shape."""
    assert inputs.shape == targets.shape
    orig_shape = inputs.shape

    # dtype policy: bf16/f16/f32 pass through (cast to f32 in-kernel); fp8 and
    # non-float inputs are promoted to f32 so the per-element loss is exact.
    def _as_io(a):
        if jnp.issubdtype(a.dtype, jnp.floating) and a.dtype.itemsize >= 2:
            return a
        return a.astype(jnp.float32)

    x = _as_io(inputs)
    t = _as_io(targets)
    out_dtype = jnp.dtype(x.dtype if out_dtype is None else out_dtype)

    n = x.size
    if n == 0:
        return jnp.zeros(orig_shape, out_dtype)

    xf = x.reshape(-1)
    tf = t.reshape(-1)

    # Lane-dense (M, 128) view.  When n % 128 == 0 (the common case) this is a
    # free reshape: no input pad and no output slice; the ragged row tail
    # (M % tile_m) is handled by Pallas' partial last block.
    tail = n % LANE
    if tail:
        # TODO(synk): rare fallback (n % 128 != 0) still pays one pad + one
        # slice pass; a zero-copy version needs a separate ragged 1-D tail kernel.
        pad = LANE - tail
        xf = jnp.pad(xf, (0, pad))
        tf = jnp.pad(tf, (0, pad))
    M = xf.size // LANE
    x2 = xf.reshape(M, LANE)
    t2 = tf.reshape(M, LANE)

    in_item = x2.dtype.itemsize
    out_item = out_dtype.itemsize
    min_item = min(in_item, t2.dtype.itemsize, out_item)
    row_align = 8 * max(1, 4 // min_item)     # packed sublane multiple: 8 f32 / 16 bf16,f16

    # Generation-aware tiling: the kernel body carries a few f32 temporaries of
    # the block shape, so size blocks off the f32 footprint.
    # 128 MiB VMEM (v5e/v6e) -> ~8 MiB f32 blocks; 64 MiB (v7x) -> ~4 MiB.
    vmem = _vmem_capacity_bytes()
    per_block_f32 = min(8 * _MIB, max(2 * _MIB, vmem // 16))
    tile_m = per_block_f32 // (LANE * 4)
    tile_m = max(row_align, (tile_m // row_align) * row_align)
    tile_m = min(tile_m, M)

    if tile_m == M and (M // 2) * LANE * 4 >= _MIN_SPLIT_HALF_BYTES:
        # Split a single whole-array block in two so a dual-TensorCore chip
        # (v7x) can shard the "parallel" grid axis; gated so single-TC chips
        # only ever pay one extra ~0.35us step when the halves are large.
        tile_m = (((M + 1) // 2 + row_align - 1) // row_align) * row_align

    grid = (pl.cdiv(M, tile_m),)

    # VMEM budget: 2 pipeline buffers x 3 operand blocks + headroom for the
    # kernel's f32 temporaries (worst case ~4 tile-sized live values).
    block_io_bytes = tile_m * LANE * (in_item + t2.dtype.itemsize + out_item)
    temp_bytes = 4 * tile_m * LANE * 4
    vmem_limit = max(32 * _MIB,
                     min(vmem - 16 * _MIB, 2 * block_io_bytes + temp_bytes + 8 * _MIB))

    gf = float(gamma)
    gamma_int = int(gf) if gf.is_integer() and 0.0 <= gf <= 64.0 else None
    kernel = functools.partial(
        _focal_kernel, alpha=float(alpha), gamma=gf, gamma_int=gamma_int)

    cost = pl.CostEstimate(
        flops=10 * n,
        transcendentals=3 * n,
        bytes_accessed=n * (in_item + t2.dtype.itemsize + out_item),
    )

    out2 = pl.pallas_call(
        kernel,
        out_shape=jax.ShapeDtypeStruct((M, LANE), out_dtype),
        grid_spec=pltpu.PrefetchScalarGridSpec(
            num_scalar_prefetch=0,
            grid=grid,
            in_specs=[
                pl.BlockSpec((tile_m, LANE), lambda i: (i, 0)),
                pl.BlockSpec((tile_m, LANE), lambda i: (i, 0)),
            ],
            out_specs=pl.BlockSpec((tile_m, LANE), lambda i: (i, 0)),
        ),
        compiler_params=pltpu.CompilerParams(
            # "parallel" lets the runtime shard this 1-D grid across both
            # TensorCores on v7x.
            # TODO(synk): confirm in xprof that v7x runs both TCs; if not,
            # switch to pltpu.CORE_PARALLEL.
            dimension_semantics=("parallel",),
            vmem_limit_bytes=int(vmem_limit),
        ),
        cost_estimate=cost,
    )(x2, t2)

    if tail:
        return out2.reshape(-1)[:n].reshape(orig_shape)
    return out2.reshape(orig_shape)


def focal_loss_ref(inputs, targets, alpha=ALPHA, gamma=GAMMA):
    x = inputs.astype(jnp.float32)
    t = targets.astype(jnp.float32)
    bce = jnp.maximum(x, 0.0) - x * t + jnp.log1p(jnp.exp(-jnp.abs(x)))
    p = jnp.exp(-bce)
    return alpha * (1.0 - p) ** gamma * bce


if __name__ == "__main__":
    key = jax.random.PRNGKey(0)
    k1, k2 = jax.random.split(key)
    # NCHW, small shapes consistent with the module's typical use.
    N, C, H, W = 2, 4, 16, 16
    inputs = jax.random.normal(k1, (N, C, H, W), dtype=jnp.float32) * 2.0
    targets = jax.random.bernoulli(k2, p=0.5, shape=(N, C, H, W)).astype(jnp.float32)

    out = focal_loss_pallas(inputs, targets)
    out = jax.block_until_ready(out)

    ref = focal_loss_ref(inputs, targets)
    assert out.shape == (N, C, H, W)
    assert out.dtype == inputs.dtype
    assert jnp.allclose(out, ref, atol=1e-5, rtol=1e-5), "mismatch vs reference"
    print("KERNEL_OK")
</pallas_src>

<mosaic_0001>
module attributes {stable_mosaic.version = 11 : i64} {
  func.func @_focal_kernel(%arg0: i32, %arg1: memref<16x128xf32, #tpu.memory_space<vmem>>, %arg2: memref<16x128xf32, #tpu.memory_space<vmem>>, %arg3: memref<16x128xf32, #tpu.memory_space<vmem>>) attributes {dimension_semantics = [#tpu.dimension_semantics<parallel>], iteration_bounds = array<i64: 1>, scalar_prefetch = 0 : i64, scratch_operands = 0 : i64, tpu.core_type = #tpu.core_type<tc>, window_params = [{transform_indices = @transform_0, window_bounds = array<i64: 16, 128>}, {transform_indices = @transform_1, window_bounds = array<i64: 16, 128>}, {transform_indices = @transform_2, window_bounds = array<i64: 16, 128>}]} {
    %c0 = arith.constant 0 : index
    %c0_0 = arith.constant 0 : index
    %0 = vector.load %arg1[%c0, %c0_0] : memref<16x128xf32, #tpu.memory_space<vmem>>, vector<16x128xf32>
    %c0_1 = arith.constant 0 : index
    %c0_2 = arith.constant 0 : index
    %1 = vector.load %arg2[%c0_1, %c0_2] : memref<16x128xf32, #tpu.memory_space<vmem>>, vector<16x128xf32>
    %2 = math.absf %0 : vector<16x128xf32>
    %cst = arith.constant 0.000000e+00 : f32
    %3 = vector.broadcast %cst : f32 to vector<16x128xf32>
    %4 = arith.subf %3, %2 : vector<16x128xf32>
    %5 = math.exp %4 : vector<16x128xf32>
    %cst_3 = arith.constant 0.000000e+00 : f32
    %6 = vector.broadcast %cst_3 : f32 to vector<16x128xf32>
    %7 = arith.maximumf %0, %6 : vector<16x128xf32>
    %8 = arith.mulf %0, %1 : vector<16x128xf32>
    %9 = arith.subf %7, %8 : vector<16x128xf32>
    %10 = math.log1p %5 : vector<16x128xf32>
    %11 = arith.addf %9, %10 : vector<16x128xf32>
    %cst_4 = arith.constant 0.000000e+00 : f32
    %12 = vector.broadcast %cst_4 : f32 to vector<16x128xf32>
    %13 = arith.subf %12, %11 : vector<16x128xf32>
    %14 = math.exp %13 : vector<16x128xf32>
    %cst_5 = arith.constant 1.000000e+00 : f32
    %15 = vector.broadcast %cst_5 : f32 to vector<16x128xf32>
    %16 = arith.subf %15, %14 : vector<16x128xf32>
    %17 = arith.mulf %16, %16 : vector<16x128xf32>
    %18 = arith.mulf %17, %11 : vector<16x128xf32>
    %c0_6 = arith.constant 0 : index
    %c0_7 = arith.constant 0 : index
    %19 = vector.load %arg3[%c0_6, %c0_7] : memref<16x128xf32, #tpu.memory_space<vmem>>, vector<16x128xf32>
    tpu.vector_store %arg3[%c0_6, %c0_7], %18 {strides = array<i32>} : memref<16x128xf32, #tpu.memory_space<vmem>>, vector<16x128xf32>,
    return
  }
  func.func @transform_0(%arg0: i32) -> (i32, i32) {
    %c0_i32 = arith.constant 0 : i32
    %c0_i32_0 = arith.constant 0 : i32
    return %arg0, %c0_i32 : i32, i32
  }
  func.func @transform_1(%arg0: i32) -> (i32, i32) {
    %c0_i32 = arith.constant 0 : i32
    %c0_i32_0 = arith.constant 0 : i32
    return %arg0, %c0_i32 : i32, i32
  }
  func.func @transform_2(%arg0: i32) -> (i32, i32) {
    %c0_i32 = arith.constant 0 : i32
    %c0_i32_0 = arith.constant 0 : i32
    return %arg0, %c0_i32 : i32, i32
  }
}

</mosaic_0001>

<llo_original>
// kernel: tpu_custom_call.1
$region0: #{tpu_custom_call.1}
  #allocation0 [shape = 'u32[]', space=smem, size = 0x4, offset = 0x4, fixed_abs, tag = 'smem constant byte address 0x4 - core index']
  #allocation1 [shape = 'u32[144,128]{1,0:T(1,128)}', space=vmem, size = 0x12000, scoped, tag = 'internal scratch']
  %s0 = inlined_call_operand.hbm [shape: f32[16,128], index: 0, kind: input, shape index: {}]
  %s1 = inlined_call_operand.hbm [shape: f32[16,128], index: 1, kind: input, shape index: {}]
  %s2 = inlined_call_operand.hbm [shape: f32[16,128], index: 2, kind: output, shape index: {}]
  %s3 = sld [smem:[#allocation0]]
  $region26: #{tpu_custom_call.1} parent=0
    _
  %s5 = ssub.s32 1, %s3
  %s6 = scalar_select 0, %s5, %s3
  $region1: #{tpu_custom_call.1} parent=0
    #allocation2 [shape = 'u8[8192]{0}', space=vmem, size = 0x2000, scoped, tag = 'input window, operand 0, single buffered']
    #allocation3 [shape = 's32[1]{0}', space=sflag, size = 0x4, scoped, tag = 'scoped memory for tpu_custom_call.1']
    #allocation4 [shape = 's32[1]{0}', space=sflag, size = 0x4, scoped, tag = 'scoped memory for tpu_custom_call.1']
    #allocation5 [shape = 'u8[8192]{0}', space=vmem, size = 0x2000, scoped, tag = 'input window, operand 1, single buffered']
    #allocation6 [shape = 's32[1]{0}', space=sflag, size = 0x4, scoped, tag = 'scoped memory for tpu_custom_call.1']
    #allocation7 [shape = 'u8[8192]{0}', space=vmem, size = 0x2000, scoped, tag = 'output window, operand 0, single buffered']
    %7 = vsyncpa [#allocation3], 0
    %8 = vsyncpa [#allocation6], 0
    %9 = vsyncpa [#allocation4], 0
    // Predicated region
    $region2: #{tpu_custom_call.1} parent=1 // pred_check
      _
    $region3: #{tpu_custom_call.1} parent=1 // pred_check_branch
      %11 = sbr.rel (0) target = $region5
    $region4: #{tpu_custom_call.1} parent=1 // pred_region
      %s13 = ssub.s32 256, 256
      %14 = vsyncadd [#allocation3], %s13
      %s15 = sshll.u32 [#allocation2], 4
      %s16 = int_to_ptr.vmem [resolvable:$true] %s15
      %21 = dma.hbm_to_vmem [thread:$0]  %s0, 256, %s16, [#allocation3], 128, 128, 8
    $region5: #{tpu_custom_call.1} parent=1 // pred_fallthru
      _
    // Predicated region
    $region6: #{tpu_custom_call.1} parent=1 // pred_check
      _
    $region7: #{tpu_custom_call.1} parent=1 // pred_check_branch
      %23 = sbr.rel (0) target = $region9
    $region8: #{tpu_custom_call.1} parent=1 // pred_region
      %s25 = ssub.s32 256, 256
      %26 = vsyncadd [#allocation6], %s25
      %s27 = sshll.u32 [#allocation5], 4
      %s28 = int_to_ptr.vmem [resolvable:$true] %s27
      %33 = dma.hbm_to_vmem [thread:$0]  %s1, 256, %s28, [#allocation6], 128, 128, 8
    $region9: #{tpu_custom_call.1} parent=1 // pred_fallthru
      _
    // Predicated region
    $region10: #{tpu_custom_call.1} parent=1 // pred_check
      _
    $region11: #{tpu_custom_call.1} parent=1 // pred_check_branch
      %35 = sbr.rel (0) target = $region13
    $region12: #{tpu_custom_call.1} parent=1 // pred_region
      %36 = dma.done [#allocation3], 256
    $region13: #{tpu_custom_call.1} parent=1 // pred_fallthru
      _
    // Predicated region
    $region14: #{tpu_custom_call.1} parent=1 // pred_check
      _
    $region15: #{tpu_custom_call.1} parent=1 // pred_check_branch
      %38 = sbr.rel (0) target = $region17
    $region16: #{tpu_custom_call.1} parent=1 // pred_region
      %39 = dma.done [#allocation6], 256
    $region17: #{tpu_custom_call.1} parent=1 // pred_fallthru
      _
    %v40 = vld [vmem:[#allocation2] sm:$0xff]
    %v41 = vld [vmem:[#allocation2 + $0x8] sm:$0xff]
    %v42 = vld [vmem:[#allocation5] sm:$0xff]
    %v43 = vld [vmem:[#allocation5 + $0x8] sm:$0xff]
    %v44 = vand.u32 2147483647, %v40
    %v45 = vand.u32 2147483647, %v41
    %v46 = vsub.f32 0.0, %v44
    %v47 = vsub.f32 0.0, %v45
    %v48 = vmul.f32 %v46, 1.442695
    %v49 = vpow.pop %v48
    %v50 = vmul.f32 %v47, 1.442695
    %v51 = vpow.pop %v50
    %v52 = vmax.f32 %v40, 0.0
    %v53 = vmax.f32 %v41, 0.0
    %v54 = vmul.f32 %v40, %v42
    %v55 = vmul.f32 %v41, %v43
    %v56 = vsub.f32 %v52, %v54
    %v57 = vsub.f32 %v53, %v55
    %v58 = vadd.f32 %v49, 1.0
    %v59 = vlog2.pop %v58
    %v60 = vmul.f32 %v59, 0.6931472
    %v61 = vmul.f32 -0.5, %v49
    %v62 = vadd.f32 %v61, 1.0
    %v63 = vmul.f32 %v62, %v49
    %v64 = vand.u32 2147483647, %v49
    %vm65 = vcmp.lt.f32.partialorder %v64, 0.0004427343
    %v66 = vsel %vm65, %v63, %v60
    %v67 = vadd.f32 %v51, 1.0
    %v68 = vlog2.pop %v67
    %v69 = vmul.f32 %v68, 0.6931472
    %v70 = vmul.f32 -0.5, %v51
    %v71 = vadd.f32 %v70, 1.0
    %v72 = vmul.f32 %v71, %v51
    %v73 = vand.u32 2147483647, %v51
    %vm74 = vcmp.lt.f32.partialorder %v73, 0.0004427343
    %v75 = vsel %vm74, %v72, %v69
    %v76 = vadd.f32 %v56, %v66
    %v77 = vadd.f32 %v57, %v75
    %v78 = vsub.f32 0.0, %v76
    %v79 = vsub.f32 0.0, %v77
    %v80 = vmul.f32 %v78, 1.442695
    %v81 = vpow.pop %v80
    %v82 = vmul.f32 %v79, 1.442695
    %v83 = vpow.pop %v82
    %v84 = vsub.f32 1.0, %v81
    %v85 = vsub.f32 1.0, %v83
    %v86 = vmul.f32 %v84, %v84
    %v87 = vmul.f32 %v85, %v85
    %v88 = vmul.f32 %v86, %v76
    %v89 = vmul.f32 %v87, %v77
    %90 = vst [vmem:[#allocation7] sm:$0xff] %v88
    %91 = vst [vmem:[#allocation7 + $0x8] sm:$0xff] %v89
    // Predicated region
    $region18: #{tpu_custom_call.1} parent=1 // pred_check
      _
    $region19: #{tpu_custom_call.1} parent=1 // pred_check_branch
      %93 = sbr.rel (0) target = $region21
    $region20: #{tpu_custom_call.1} parent=1 // pred_region
      %s95 = ssub.s32 256, 256
      %96 = vsyncadd [#allocation4], %s95
      %s97 = sshll.u32 [#allocation7], 4
      %s98 = int_to_ptr.vmem [resolvable:$true] %s97
      %103 = dma.vmem_to_hbm [thread:$0]  %s98, 256, %s2, [#allocation4], 128, 128, 8
    $region21: #{tpu_custom_call.1} parent=1 // pred_fallthru
      _
    // Predicated region
    $region22: #{tpu_custom_call.1} parent=1 // pred_check
      _
    $region23: #{tpu_custom_call.1} parent=1 // pred_check_branch
      %105 = sbr.rel (0) target = $region25
    $region24: #{tpu_custom_call.1} parent=1 // pred_region
      %106 = dma.done [#allocation4], 256
    $region25: #{tpu_custom_call.1} parent=1 // pred_fallthru
      _
    %107 = vsyncpa [#allocation3], 1
    %108 = vsyncpa [#allocation6], 1
    %109 = vsyncpa [#allocation4], 1

</llo_original>
